<compile_context>
chip_gen: v5e
topology: v5e:2x2
jax: 0.10.0
libtpu: 0.0.40
codegen_flags: <defaults>
</compile_context>

<pallas_src>
import functools
import math

import jax
import jax.numpy as jnp
from jax.experimental import pallas as pl
from jax.experimental.pallas import tpu as pltpu


# ---------------------------------------------------------------------------
# Linear (matmul + bias) kernel: bf16 MXU operands, f32 accumulator scratch
# ---------------------------------------------------------------------------
def _linear_kernel(x_ref, w_ref, b_ref, o_ref, acc_ref):
    k = pl.program_id(2)

    @pl.when(k == 0)
    def _():
        acc_ref[...] = jnp.zeros_like(acc_ref)

    acc_ref[...] += jnp.dot(
        x_ref[...].astype(jnp.bfloat16),
        w_ref[...].astype(jnp.bfloat16),
        preferred_element_type=jnp.float32,
    )

    @pl.when(k == pl.num_programs(2) - 1)
    def _():
        o_ref[...] = (acc_ref[...] + b_ref[...].astype(jnp.float32)).astype(o_ref.dtype)


def _pick_tile(dim, preferred, align):
    """Largest tile <= `preferred` that divides `dim` and is `align`-aligned.

    Full-dim blocks are always layout-legal, so small dims pass through; for
    large non-divisible dims we search for an aligned divisor instead of
    silently requesting a full-dim block that could blow scoped VMEM.
    """
    if dim <= preferred:
        return dim
    for t in range(preferred, align - 1, -1):
        if t % align == 0 and dim % t == 0:
            return t
    # TODO(synk): switch to a pl.cdiv grid with a masked tail for pathological
    # (e.g. prime) dims instead of a full-dimension block.
    return dim


def linear(x, w, b, *, tm=512, tn=512, tk=512):
    """y = x @ w + b with x:(M,K), w:(K,N), b:(N,)."""
    M, K = x.shape
    Kw, N = w.shape
    assert K == Kw and b.shape == (N,)
    tm = _pick_tile(M, tm, 8)     # sublane-aligned
    tn = _pick_tile(N, tn, 128)   # lane-aligned
    tk = _pick_tile(K, tk, 128)   # lane (x) + sublane (w) aligned
    b2d = b.reshape(1, N)

    return pl.pallas_call(
        _linear_kernel,
        out_shape=jax.ShapeDtypeStruct((M, N), x.dtype),
        grid_spec=pltpu.PrefetchScalarGridSpec(
            num_scalar_prefetch=0,
            grid=(M // tm, N // tn, K // tk),
            in_specs=[
                pl.BlockSpec((tm, tk), lambda i, j, k: (i, k)),
                pl.BlockSpec((tk, tn), lambda i, j, k: (k, j)),
                pl.BlockSpec((1, tn), lambda i, j, k: (0, j)),
            ],
            out_specs=pl.BlockSpec((tm, tn), lambda i, j, k: (i, j)),
            scratch_shapes=[pltpu.VMEM((tm, tn), jnp.float32)],
        ),
        compiler_params=pltpu.CompilerParams(
            dimension_semantics=("parallel", "parallel", "arbitrary"),
            vmem_limit_bytes=48 * 1024 * 1024,   # safe on v7x's 64 MiB physical VMEM
        ),
    )(x, w, b2d)


# ---------------------------------------------------------------------------
# Attention kernel: one batch per grid step, all heads, fused head-0 RoPE,
# lane-dense (S, H*hd) output tile.
# ---------------------------------------------------------------------------
def _attn_kernel(qkv_ref, cos_ref, sin_ref, rot_ref, o_ref, *, num_heads, scale):
    inner = o_ref.shape[-1]
    hd = inner // num_heads

    qkv = qkv_ref[...]                                   # (S, 3*inner)
    q = qkv[:, :inner].astype(jnp.float32)
    k = qkv[:, inner:2 * inner].astype(jnp.float32)
    v = qkv[:, 2 * inner:].astype(jnp.bfloat16)

    cos = cos_ref[...].astype(jnp.float32)               # (S, hd)
    sin = sin_ref[...].astype(jnp.float32)
    rot = rot_ref[...].astype(jnp.float32)               # (hd, hd) rotate_half matrix

    # TODO(synk): for long sequences, tile the KV (and Q) axis with an
    # online-softmax (flash) accumulator instead of one full (S, S) score
    # block per head (needed for v7x's 64 MiB VMEM / v5e's 16 MiB default).
    outs = []
    for h in range(num_heads):                           # static unroll over heads
        sl = slice(h * hd, (h + 1) * hd)
        qh = q[:, sl]
        kh = k[:, sl]
        vh = v[:, sl]
        if h == 0:
            # RoPE on head 0 only; rotate_half expressed as a tiny +/-1 matmul.
            qh = qh * cos + jnp.dot(qh, rot, preferred_element_type=jnp.float32) * sin
            kh = kh * cos + jnp.dot(kh, rot, preferred_element_type=jnp.float32) * sin
        s = jax.lax.dot_general(
            qh.astype(jnp.bfloat16), kh.astype(jnp.bfloat16),
            (((1,), (1,)), ((), ())),
            preferred_element_type=jnp.float32,
        ) * scale                                        # (S, S)
        m = jnp.max(s, axis=-1, keepdims=True)
        p = jnp.exp(s - m)
        denom = jnp.sum(p, axis=-1, keepdims=True)
        oh = jnp.dot(p.astype(jnp.bfloat16), vh, preferred_element_type=jnp.float32)
        outs.append(oh * pl.reciprocal(denom, approx=True))

    o_ref[...] = jnp.concatenate(outs, axis=-1).astype(o_ref.dtype)


def attention(qkv3, cos, sin, rot, *, num_heads, scale, out_dtype):
    """qkv3: (B, S, 3*inner) fused projections; cos/sin: (B, S, hd); rot: (hd, hd).

    Returns attention output in (B, S, inner) layout (lane-dense, ready for the
    output projection without any transpose).
    """
    B, S, three_inner = qkv3.shape
    inner = three_inner // 3
    hd = inner // num_heads

    return pl.pallas_call(
        functools.partial(_attn_kernel, num_heads=num_heads, scale=scale),
        out_shape=jax.ShapeDtypeStruct((B, S, inner), out_dtype),
        grid_spec=pltpu.PrefetchScalarGridSpec(
            num_scalar_prefetch=0,
            grid=(B,),
            in_specs=[
                pl.BlockSpec((None, S, three_inner), lambda b: (b, 0, 0)),
                pl.BlockSpec((None, S, hd), lambda b: (b, 0, 0)),
                pl.BlockSpec((None, S, hd), lambda b: (b, 0, 0)),
                pl.BlockSpec((hd, hd), lambda b: (0, 0)),
            ],
            out_specs=pl.BlockSpec((None, S, inner), lambda b: (b, 0, 0)),
        ),
        compiler_params=pltpu.CompilerParams(
            dimension_semantics=("parallel",),
            vmem_limit_bytes=48 * 1024 * 1024,
        ),
    )(qkv3, cos, sin, rot)


# ---------------------------------------------------------------------------
# Full DiTAttention forward
# ---------------------------------------------------------------------------
def _rotate_half(t):
    t1, t2 = jnp.split(t, 2, axis=-1)
    return jnp.concatenate([-t2, t1], axis=-1)


def _rotate_half_matrix(hd, dtype=jnp.float32):
    """Constant matrix R with x @ R == rotate_half(x) for x of width hd."""
    half = hd // 2
    eye = jnp.eye(half, dtype=dtype)
    zeros = jnp.zeros((half, half), dtype=dtype)
    top = jnp.concatenate([zeros, eye], axis=1)    # rows 0..half-1
    bot = jnp.concatenate([-eye, zeros], axis=1)   # rows half..hd-1
    return jnp.concatenate([top, bot], axis=0)


def dit_attention(hidden_states, w_qkv, b_qkv, w_out, b_out, cos, sin, *, num_heads):
    """hidden_states: (B, S, D); w_qkv: (D, 3*inner); cos/sin: (B, S, head_dim)."""
    B, S, D = hidden_states.shape
    inner = w_qkv.shape[1] // 3
    hd = inner // num_heads

    # Fused QKV projection: one lane-dense matmul instead of three.
    x2d = hidden_states.reshape(B * S, D)
    qkv = linear(x2d, w_qkv, b_qkv)                      # (B*S, 3*inner)
    qkv3 = qkv.reshape(B, S, 3 * inner)                  # free reshape (leading dims)

    rot = _rotate_half_matrix(hd, dtype=jnp.float32)
    # TODO(synk): attention_mask is not supported (module default is None).
    o = attention(qkv3, cos, sin, rot, num_heads=num_heads,
                  scale=1.0 / math.sqrt(hd),
                  out_dtype=hidden_states.dtype)         # (B, S, inner)

    # Output projection; nn.Dropout is identity at inference.
    out = linear(o.reshape(B * S, inner), w_out, b_out)  # (B*S, D)
    return out.reshape(B, S, D)


# ---------------------------------------------------------------------------
# Pure-JAX reference for validation
# ---------------------------------------------------------------------------
def dit_attention_reference(x, w_qkv, b_qkv, w_out, b_out, cos, sin, *, num_heads):
    B, S, D = x.shape
    inner = w_qkv.shape[1] // 3
    hd = inner // num_heads
    qkv = x.reshape(B * S, D) @ w_qkv + b_qkv
    q, k, v = jnp.split(qkv, 3, axis=-1)
    to_heads = lambda t: t.reshape(B, S, num_heads, hd).transpose(0, 2, 1, 3)
    q, k, v = to_heads(q), to_heads(k), to_heads(v)
    q = q.at[:, 0].set(q[:, 0] * cos + _rotate_half(q[:, 0]) * sin)
    k = k.at[:, 0].set(k[:, 0] * cos + _rotate_half(k[:, 0]) * sin)
    s = jnp.einsum("bhqd,bhkd->bhqk", q, k) / math.sqrt(hd)
    p = jax.nn.softmax(s, axis=-1)
    o = jnp.einsum("bhqk,bhkd->bhqd", p, v)
    o = o.transpose(0, 2, 1, 3).reshape(B * S, inner)
    return (o @ w_out + b_out).reshape(B, S, D)


if __name__ == "__main__":
    B, S = 2, 8
    hidden = 32          # config.hidden_size
    heads = 2            # config.num_attention_heads
    hd = 64              # config.head_dim
    inner = heads * hd   # inner_dim

    key = jax.random.PRNGKey(0)
    kx, kq, kk, kv, ko, kb = jax.random.split(key, 6)

    x = jax.random.normal(kx, (B, S, hidden), dtype=jnp.float32)
    w_q = 0.1 * jax.random.normal(kq, (hidden, inner), dtype=jnp.float32)
    w_k = 0.1 * jax.random.normal(kk, (hidden, inner), dtype=jnp.float32)
    w_v = 0.1 * jax.random.normal(kv, (hidden, inner), dtype=jnp.float32)
    w_o = 0.1 * jax.random.normal(ko, (inner, hidden), dtype=jnp.float32)
    biases = 0.1 * jax.random.normal(kb, (3 * inner + hidden,), dtype=jnp.float32)
    b_qkv = biases[: 3 * inner]
    b_o = biases[3 * inner:]
    w_qkv = jnp.concatenate([w_q, w_k, w_v], axis=1)     # (hidden, 3*inner)

    # Standard rotary position embeddings for head_dim = hd.
    pos = jnp.arange(S, dtype=jnp.float32)
    inv_freq = 1.0 / (10000.0 ** (jnp.arange(0, hd, 2, dtype=jnp.float32) / hd))
    freqs = jnp.outer(pos, inv_freq)                     # (S, hd//2)
    emb = jnp.concatenate([freqs, freqs], axis=-1)       # (S, hd)
    cos = jnp.broadcast_to(jnp.cos(emb), (B, S, hd))
    sin = jnp.broadcast_to(jnp.sin(emb), (B, S, hd))

    out = dit_attention(x, w_qkv, b_qkv, w_o, b_o, cos, sin, num_heads=heads)
    out = jax.block_until_ready(out)

    ref = dit_attention_reference(x, w_qkv, b_qkv, w_o, b_o, cos, sin, num_heads=heads)
    assert out.shape == (B, S, hidden) and out.dtype == x.dtype
    max_diff = jnp.max(jnp.abs(out - ref))
    assert jnp.allclose(out, ref, atol=2e-2, rtol=2e-2), (
        f"mismatch vs reference: max abs diff {max_diff}"
    )

    print("KERNEL_OK")
</pallas_src>

<mosaic_0001>
module attributes {stable_mosaic.version = 11 : i64} {
  func.func @_linear_kernel(%arg0: i32, %arg1: i32, %arg2: i32, %arg3: memref<16x32xf32, #tpu.memory_space<vmem>>, %arg4: memref<32x384xf32, #tpu.memory_space<vmem>>, %arg5: memref<1x384xf32, #tpu.memory_space<vmem>>, %arg6: memref<16x384xf32, #tpu.memory_space<vmem>>, %arg7: memref<16x384xf32, #tpu.memory_space<vmem>>) attributes {dimension_semantics = [#tpu.dimension_semantics<parallel>, #tpu.dimension_semantics<parallel>, #tpu.dimension_semantics<arbitrary>], iteration_bounds = array<i64: 1, 1, 1>, scalar_prefetch = 0 : i64, scratch_operands = 1 : i64, tpu.core_type = #tpu.core_type<tc>, window_params = [{transform_indices = @transform_0, window_bounds = array<i64: 16, 32>}, {transform_indices = @transform_1, window_bounds = array<i64: 32, 384>}, {transform_indices = @transform_2, window_bounds = array<i64: 1, 384>}, {transform_indices = @transform_3, window_bounds = array<i64: 16, 384>}]} {
    %c0_i32 = arith.constant 0 : i32
    %0 = arith.cmpi eq, %arg2, %c0_i32 : i32
    %1 = arith.extui %0 : i1 to i32
    %c0_i32_0 = arith.constant 0 : i32
    %2 = arith.cmpi ne, %1, %c0_i32_0 : i32
    scf.if %2 {
      %cst_10 = arith.constant 0.000000e+00 : f32
      %14 = vector.broadcast %cst_10 : f32 to vector<16x384xf32>
      %c0_11 = arith.constant 0 : index
      %c0_12 = arith.constant 0 : index
      %15 = vector.load %arg7[%c0_11, %c0_12] : memref<16x384xf32, #tpu.memory_space<vmem>>, vector<16x384xf32>
      tpu.vector_store %arg7[%c0_11, %c0_12], %14 {strides = array<i32>} : memref<16x384xf32, #tpu.memory_space<vmem>>, vector<16x384xf32>,
    } else {
    }
    %c0 = arith.constant 0 : index
    %c0_1 = arith.constant 0 : index
    %3 = vector.load %arg7[%c0, %c0_1] : memref<16x384xf32, #tpu.memory_space<vmem>>, vector<16x384xf32>
    %c0_2 = arith.constant 0 : index
    %c0_3 = arith.constant 0 : index
    %4 = vector.load %arg3[%c0_2, %c0_3] : memref<16x32xf32, #tpu.memory_space<vmem>>, vector<16x32xf32>
    %5 = arith.truncf %4 : vector<16x32xf32> to vector<16x32xbf16>
    %c0_4 = arith.constant 0 : index
    %c0_5 = arith.constant 0 : index
    %6 = vector.load %arg4[%c0_4, %c0_5] : memref<32x384xf32, #tpu.memory_space<vmem>>, vector<32x384xf32>
    %7 = arith.truncf %6 : vector<32x384xf32> to vector<32x384xbf16>
    %cst = arith.constant dense<0.000000e+00> : vector<16x384xf32>
    %8 = tpu.matmul %5, %7, %cst {dimension_numbers = #tpu.dot_dimension_numbers<[1], [0], [0], [1], [0, 0, 1, 1], [], []>} : vector<16x32xbf16>, vector<32x384xbf16>, vector<16x384xf32> -> vector<16x384xf32>
    %9 = arith.addf %3, %8 : vector<16x384xf32>
    %c0_6 = arith.constant 0 : index
    %c0_7 = arith.constant 0 : index
    %10 = vector.load %arg7[%c0_6, %c0_7] : memref<16x384xf32, #tpu.memory_space<vmem>>, vector<16x384xf32>
    tpu.vector_store %arg7[%c0_6, %c0_7], %9 {strides = array<i32>} : memref<16x384xf32, #tpu.memory_space<vmem>>, vector<16x384xf32>,
    %c0_i32_8 = arith.constant 0 : i32
    %11 = arith.cmpi eq, %arg2, %c0_i32_8 : i32
    %12 = arith.extui %11 : i1 to i32
    %c0_i32_9 = arith.constant 0 : i32
    %13 = arith.cmpi ne, %12, %c0_i32_9 : i32
    scf.if %13 {
      %c0_10 = arith.constant 0 : index
      %c0_11 = arith.constant 0 : index
      %14 = vector.load %arg7[%c0_10, %c0_11] : memref<16x384xf32, #tpu.memory_space<vmem>>, vector<16x384xf32>
      %c0_12 = arith.constant 0 : index
      %c0_13 = arith.constant 0 : index
      %15 = vector.load %arg5[%c0_12, %c0_13] : memref<1x384xf32, #tpu.memory_space<vmem>>, vector<1x384xf32>
      %16 = vector.broadcast %15 : vector<1x384xf32> to vector<16x384xf32>
      %17 = arith.addf %14, %16 : vector<16x384xf32>
      %c0_14 = arith.constant 0 : index
      %c0_15 = arith.constant 0 : index
      %18 = vector.load %arg6[%c0_14, %c0_15] : memref<16x384xf32, #tpu.memory_space<vmem>>, vector<16x384xf32>
      tpu.vector_store %arg6[%c0_14, %c0_15], %17 {strides = array<i32>} : memref<16x384xf32, #tpu.memory_space<vmem>>, vector<16x384xf32>,
    } else {
    }
    return
  }
  func.func @transform_0(%arg0: i32, %arg1: i32, %arg2: i32) -> (i32, i32) {
    %c0_i32 = arith.constant 0 : i32
    return %arg0, %arg2 : i32, i32
  }
  func.func @transform_1(%arg0: i32, %arg1: i32, %arg2: i32) -> (i32, i32) {
    %c0_i32 = arith.constant 0 : i32
    return %arg2, %arg1 : i32, i32
  }
  func.func @transform_2(%arg0: i32, %arg1: i32, %arg2: i32) -> (i32, i32) {
    %c0_i32 = arith.constant 0 : i32
    %c0_i32_0 = arith.constant 0 : i32
    return %c0_i32, %arg1 : i32, i32
  }
  func.func @transform_3(%arg0: i32, %arg1: i32, %arg2: i32) -> (i32, i32) {
    %c0_i32 = arith.constant 0 : i32
    return %arg0, %arg1 : i32, i32
  }
}

</mosaic_0001>

<llo_original>
// kernel: tpu_custom_call.1
$region0: #{tpu_custom_call.1}
  #allocation0 [shape = 'u32[]', space=smem, size = 0x4, offset = 0x4, fixed_abs, tag = 'smem constant byte address 0x4 - core index']
  #allocation1 [shape = 'u32[72,128]{1,0:T(1,128)}', space=vmem, size = 0x9000, scoped, tag = 'internal scratch']
  #allocation2 [shape = 'f32[16,384]{1,0:T(8,128)}', space=vmem, size = 0x6000, scoped, tag = 'scratch operand']
  %s0 = inlined_call_operand.hbm [shape: f32[16,32], index: 0, kind: input, shape index: {}]
  %s1 = inlined_call_operand.hbm [shape: f32[32,384], index: 1, kind: input, shape index: {}]
  %s2 = inlined_call_operand.hbm [shape: f32[1,384], index: 2, kind: input, shape index: {}]
  %s3 = inlined_call_operand.hbm [shape: f32[16,384], index: 3, kind: output, shape index: {}]
  %s4 = sld [smem:[#allocation0]]
  $region42: #{tpu_custom_call.1} parent=0
    _
  %s6 = ssub.s32 1, %s4
  %s7 = scalar_select 0, %s6, %s4
  $region1: #{tpu_custom_call.1} parent=0
    #allocation3 [shape = 'u8[8192]{0}', space=vmem, size = 0x2000, scoped, tag = 'input window, operand 0, single buffered']
    #allocation4 [shape = 's32[1]{0}', space=sflag, size = 0x4, scoped, tag = 'scoped memory for tpu_custom_call.1']
    #allocation5 [shape = 's32[1]{0}', space=sflag, size = 0x4, scoped, tag = 'scoped memory for tpu_custom_call.1']
    #allocation6 [shape = 'u8[49152]{0}', space=vmem, size = 0xc000, scoped, tag = 'input window, operand 1, single buffered']
    #allocation7 [shape = 's32[1]{0}', space=sflag, size = 0x4, scoped, tag = 'scoped memory for tpu_custom_call.1']
    #allocation8 [shape = 'u8[1536]{0}', space=vmem, size = 0x800, scoped, tag = 'input window, operand 2, single buffered']
    #allocation9 [shape = 'u8[24576]{0}', space=vmem, size = 0x6000, scoped, tag = 'output window, operand 0, single buffered']
    %8 = vsyncpa [#allocation4], 0
    %9 = vsyncpa [#allocation7], 0
    %10 = vsyncpa [#allocation5], 0
    // Predicated region
    $region2: #{tpu_custom_call.1} parent=1 // pred_check
      _
    $region3: #{tpu_custom_call.1} parent=1 // pred_check_branch
      %12 = sbr.rel (0) target = $region5
    $region4: #{tpu_custom_call.1} parent=1 // pred_region
      %14 = vsyncadd [#allocation4], 0
      %s15 = sshll.u32 %s0, 4
      %s16 = int_to_ptr.hbm [resolvable:$true] %s15
      %s17 = sshll.u32 [#allocation3], 4
      %s18 = int_to_ptr.vmem [resolvable:$true] %s17
      %23 = dma.hbm_to_vmem [thread:$0]  %s16, 256, %s18, [#allocation4], 128, 128, 8
    $region5: #{tpu_custom_call.1} parent=1 // pred_fallthru
      _
    // Predicated region
    $region6: #{tpu_custom_call.1} parent=1 // pred_check
      _
    $region7: #{tpu_custom_call.1} parent=1 // pred_check_branch
      %25 = sbr.rel (0) target = $region9
    $region8: #{tpu_custom_call.1} parent=1 // pred_region
      %27 = vsyncadd [#allocation7], 0
      %s28 = sshll.u32 %s1, 4
      %s29 = int_to_ptr.hbm [resolvable:$true] %s28
      %s30 = sshll.u32 [#allocation6], 4
      %s31 = int_to_ptr.vmem [resolvable:$true] %s30
      %36 = dma.hbm_to_vmem [thread:$0]  %s29, 1536, %s31, [#allocation7], 384, 384, 24
    $region9: #{tpu_custom_call.1} parent=1 // pred_fallthru
      _
    // Predicated region
    $region10: #{tpu_custom_call.1} parent=1 // pred_check
      _
    $region11: #{tpu_custom_call.1} parent=1 // pred_check_branch
      %38 = sbr.rel (0) target = $region13
    $region12: #{tpu_custom_call.1} parent=1 // pred_region
      %40 = vsyncadd [#allocation7], 0
      %s42 = sshll.u32 %s2, 4
      %s43 = int_to_ptr.hbm [resolvable:$true] %s42
      %s44 = sshll.u32 [#allocation8], 4
      %s45 = int_to_ptr.vmem [resolvable:$true] %s44
      %47 = dma.hbm_to_vmem [thread:$0]  %s43, 48, %s45, [#allocation7]
    $region13: #{tpu_custom_call.1} parent=1 // pred_fallthru
      _
    // Predicated region
    $region14: #{tpu_custom_call.1} parent=1 // pred_check
      _
    $region15: #{tpu_custom_call.1} parent=1 // pred_check_branch
      %49 = sbr.rel (0) target = $region17
    $region16: #{tpu_custom_call.1} parent=1 // pred_region
      %51 = dma.done [#allocation4], 256
    $region17: #{tpu_custom_call.1} parent=1 // pred_fallthru
      _
    // Predicated region
    $region18: #{tpu_custom_call.1} parent=1 // pred_check
      _
    $region19: #{tpu_custom_call.1} parent=1 // pred_check_branch
      %53 = sbr.rel (0) target = $region21
    $region20: #{tpu_custom_call.1} parent=1 // pred_region
      %55 = dma.done [#allocation7], 1536
    $region21: #{tpu_custom_call.1} parent=1 // pred_fallthru
      _
    // Predicated region
    $region22: #{tpu_custom_call.1} parent=1 // pred_check
      _
    $region23: #{tpu_custom_call.1} parent=1 // pred_check_branch
      %57 = sbr.rel (0) target = $region25
    $region24: #{tpu_custom_call.1} parent=1 // pred_region
      %59 = dma.done [#allocation7], 48
    $region25: #{tpu_custom_call.1} parent=1 // pred_fallthru
      _
    %p61 = scmp.eq.s32.totalorder 0, 0
    // Predicated region
    $region26: #{tpu_custom_call.1} parent=1 // pred_check
      %p62 = pneg %p61
    $region27: #{tpu_custom_call.1} parent=1 // pred_check_branch
      %64 = sbr.rel (%p62) target = $region29
    $region28: #{tpu_custom_call.1} parent=1 // pred_region
      %65 = vst [vmem:[#allocation2] sm:$0xff] 0.0
      %66 = vst [vmem:[#allocation2 + $0x8] sm:$0xff] 0.0
      %67 = vst [vmem:[#allocation2 + $0x10] sm:$0xff] 0.0
      %68 = vst [vmem:[#allocation2 + $0x18] sm:$0xff] 0.0
      %69 = vst [vmem:[#allocation2 + $0x20] sm:$0xff] 0.0
      %70 = vst [vmem:[#allocation2 + $0x28] sm:$0xff] 0.0
    $region29: #{tpu_custom_call.1} parent=1 // pred_fallthru
      _
    %v71 = vld [vmem:[#allocation2] sm:$0xff]
    %v72 = vld [vmem:[#allocation2 + $0x8] sm:$0xff]
    %v73 = vld [vmem:[#allocation2 + $0x10] sm:$0xff]
    %v74 = vld [vmem:[#allocation2 + $0x18] sm:$0xff]
    %v75 = vld [vmem:[#allocation2 + $0x20] sm:$0xff]
    %v76 = vld [vmem:[#allocation2 + $0x28] sm:$0xff]
    %v77 = vld [vmem:[#allocation3] sm:$0xff]
    %v78 = vld [vmem:[#allocation3 + $0x8] sm:$0xff]
    %v79 = vpack.c.bf16 %v78, %v77
    %v80 = vld [vmem:[#allocation6] sm:$0xff]
    %v81 = vld [vmem:[#allocation6 + $0x8] sm:$0xff]
    %v82 = vld [vmem:[#allocation6 + $0x10] sm:$0xff]
    %v83 = vld [vmem:[#allocation6 + $0x18] sm:$0xff]
    %v84 = vld [vmem:[#allocation6 + $0x20] sm:$0xff]
    %v85 = vld [vmem:[#allocation6 + $0x28] sm:$0xff]
    %v86 = vld [vmem:[#allocation6 + $0x30] sm:$0xff]
    %v87 = vld [vmem:[#allocation6 + $0x38] sm:$0xff]
    %v88 = vld [vmem:[#allocation6 + $0x40] sm:$0xff]
    %v89 = vld [vmem:[#allocation6 + $0x48] sm:$0xff]
    %v90 = vld [vmem:[#allocation6 + $0x50] sm:$0xff]
    %v91 = vld [vmem:[#allocation6 + $0x58] sm:$0xff]
    %v92 = vpack.c.bf16 %v83, %v80
    %v93 = vpack.c.bf16 %v84, %v81
    %v94 = vpack.c.bf16 %v85, %v82
    %v95 = vpack.c.bf16 %v89, %v86
    %v96 = vpack.c.bf16 %v90, %v87
    %v97 = vpack.c.bf16 %v91, %v88
    %vm98 = vcmask 261120
    %v100 = vsel %vm98, %v79, 0
    %102 = vmatpush.bf16.msra.mxu0 0
    %103 = vmatpush.bf16.msra.mxu0 0
    %104 = vmatpush.bf16.msra.mxu0 0
    %105 = vmatpush.bf16.msra.mxu0 0
    %106 = vmatpush.bf16.msra.mxu0 0
    %107 = vmatpush.bf16.msra.mxu0 0
    %108 = vmatpush.bf16.msra.mxu0 %v95
    %109 = vmatpush.bf16.msra.mxu0 %v92
    %110 = vmatmul.bf16.gmra.mxu0 %v100
    %v111 = vpop.f32.mrf.mxu0
    %v112 = vadd.f32 0.0, %v111
    %v113 = vpop.f32.mrf.mxu0
    %v114 = vadd.f32 0.0, %v113
    %115 = vdwg.mxu0
    %116 = vmatpush.bf16.msra.mxu0 0
    %117 = vmatpush.bf16.msra.mxu0 0
    %118 = vmatpush.bf16.msra.mxu0 0
    %119 = vmatpush.bf16.msra.mxu0 0
    %120 = vmatpush.bf16.msra.mxu0 0
    %121 = vmatpush.bf16.msra.mxu0 0
    %122 = vmatpush.bf16.msra.mxu0 %v96
    %123 = vmatpush.bf16.msra.mxu0 %v93
    %124 = vmatmul.bf16.gmra.mxu0 %v100
    %v125 = vpop.f32.mrf.mxu0
    %v126 = vadd.f32 0.0, %v125
    %v127 = vpop.f32.mrf.mxu0
    %v128 = vadd.f32 0.0, %v127
    %129 = vdwg.mxu0
    %130 = vmatpush.bf16.msra.mxu0 0
    %131 = vmatpush.bf16.msra.mxu0 0
    %132 = vmatpush.bf16.msra.mxu0 0
    %133 = vmatpush.bf16.msra.mxu0 0
    %134 = vmatpush.bf16.msra.mxu0 0
    %135 = vmatpush.bf16.msra.mxu0 0
    %136 = vmatpush.bf16.msra.mxu0 %v97
    %137 = vmatpush.bf16.msra.mxu0 %v94
    %138 = vmatmul.bf16.gmra.mxu0 %v100
    %v139 = vpop.f32.mrf.mxu0
    %v140 = vadd.f32 0.0, %v139
    %v141 = vpop.f32.mrf.mxu0
    %v142 = vadd.f32 0.0, %v141
    %143 = vdwg.mxu0
    %v144 = vadd.f32 %v71, %v112
    %v145 = vadd.f32 %v72, %v126
    %v146 = vadd.f32 %v73, %v140
    %v147 = vadd.f32 %v74, %v114
    %v148 = vadd.f32 %v75, %v128
    %v149 = vadd.f32 %v76, %v142
    %150 = vst [vmem:[#allocation2] sm:$0xff] %v144
    %151 = vst [vmem:[#allocation2 + $0x8] sm:$0xff] %v145
    %152 = vst [vmem:[#allocation2 + $0x10] sm:$0xff] %v146
    %153 = vst [vmem:[#allocation2 + $0x18] sm:$0xff] %v147
    %154 = vst [vmem:[#allocation2 + $0x20] sm:$0xff] %v148
    %155 = vst [vmem:[#allocation2 + $0x28] sm:$0xff] %v149
    // Predicated region
    $region30: #{tpu_custom_call.1} parent=1 // pred_check
      %p156 = pneg %p61
    $region31: #{tpu_custom_call.1} parent=1 // pred_check_branch
      %158 = sbr.rel (%p156) target = $region33
    $region32: #{tpu_custom_call.1} parent=1 // pred_region
      %v159 = vld [vmem:[#allocation2] sm:$0xff]
      %v160 = vld [vmem:[#allocation2 + $0x8] sm:$0xff]
      %v161 = vld [vmem:[#allocation2 + $0x10] sm:$0xff]
      %v162 = vld [vmem:[#allocation2 + $0x18] sm:$0xff]
      %v163 = vld [vmem:[#allocation2 + $0x20] sm:$0xff]
      %v164 = vld [vmem:[#allocation2 + $0x28] sm:$0xff]
      %v165 = vld [vmem:[#allocation8] sm:$0x7]
      %v167 = vperm.slane %v165, 0
      %v168 = vperm.slane %v165, 1
      %v169 = vperm.slane %v165, 2
      %v173 = vadd.f32 %v159, %v167
      %v174 = vadd.f32 %v160, %v168
      %v175 = vadd.f32 %v161, %v169
      %v176 = vadd.f32 %v162, %v167
      %v177 = vadd.f32 %v163, %v168
      %v178 = vadd.f32 %v164, %v169
      %179 = vst [vmem:[#allocation9] sm:$0xff] %v173
      %180 = vst [vmem:[#allocation9 + $0x8] sm:$0xff] %v174
      %181 = vst [vmem:[#allocation9 + $0x10] sm:$0xff] %v175
      %182 = vst [vmem:[#allocation9 + $0x18] sm:$0xff] %v176
      %183 = vst [vmem:[#allocation9 + $0x20] sm:$0xff] %v177
      %184 = vst [vmem:[#allocation9 + $0x28] sm:$0xff] %v178
    $region33: #{tpu_custom_call.1} parent=1 // pred_fallthru
      _
    // Predicated region
    $region34: #{tpu_custom_call.1} parent=1 // pred_check
      _
    $region35: #{tpu_custom_call.1} parent=1 // pred_check_branch
      %186 = sbr.rel (0) target = $region37
    $region36: #{tpu_custom_call.1} parent=1 // pred_region
      %188 = vsyncadd [#allocation5], 0
      %s189 = sshll.u32 [#allocation9], 4
      %s190 = int_to_ptr.vmem [resolvable:$true] %s189
      %s191 = sshll.u32 %s3, 4
      %s192 = int_to_ptr.hbm [resolvable:$true] %s191
      %197 = dma.vmem_to_hbm [thread:$0]  %s190, 768, %s192, [#allocation5], 384, 384, 24
    $region37: #{tpu_custom_call.1} parent=1 // pred_fallthru
      _
    // Predicated region
    $region38: #{tpu_custom_call.1} parent=1 // pred_check
      _
    $region39: #{tpu_custom_call.1} parent=1 // pred_check_branch
      %199 = sbr.rel (0) target = $region41
    $region40: #{tpu_custom_call.1} parent=1 // pred_region
      %201 = dma.done [#allocation5], 768
    $region41: #{tpu_custom_call.1} parent=1 // pred_fallthru
      _
    %202 = vsyncpa [#allocation4], 1
    %203 = vsyncpa [#allocation7], 1
    %204 = vsyncpa [#allocation5], 1

</llo_original>
